<compile_context>
chip_gen: v6e
topology: v6e:2x2x1
jax: 0.10.0
libtpu: 0.0.40
codegen_flags: <defaults>
</compile_context>

<pallas_src>
import jax
import jax.numpy as jnp
from jax.experimental import pallas as pl
from jax.experimental.pallas import tpu as pltpu


def add_matrix_kernel(x_ref, w_ref, o_ref):
    # Pure VPU elementwise add; single vreg, no MXU/XLU/EUP traffic.
    o_ref[...] = x_ref[...] + w_ref[...]


def add_matrix_forward(x, w):
    M, N = x.shape
    return pl.pallas_call(
        add_matrix_kernel,
        out_shape=jax.ShapeDtypeStruct((M, N), x.dtype),
        # Whole-array VMEM specs: no grid, no index_map, no (8,128) pitfalls.
        in_specs=[
            pl.BlockSpec(memory_space=pltpu.MemorySpace.VMEM),
            pl.BlockSpec(memory_space=pltpu.MemorySpace.VMEM),
        ],
        out_specs=pl.BlockSpec(memory_space=pltpu.MemorySpace.VMEM),
        # Output reuses x's buffer -> no separate HBM output allocation.
        input_output_aliases={0: 0},
        # 25 adds, 2*25 f32 read + 25 f32 written = 300 bytes.
        cost_estimate=pl.CostEstimate(flops=25, transcendentals=0,
                                      bytes_accessed=300),
    )(x, w)


def reference_forward(x, w):
    return x + w


if __name__ == "__main__":
    key = jax.random.PRNGKey(0)
    kx, kw = jax.random.split(key, 2)

    # Matches AddMatrix: w = randn(5, 5) * 5, input x = randn(5, 5).
    x = jax.random.normal(kx, (5, 5), dtype=jnp.float32)
    w = jax.random.normal(kw, (5, 5), dtype=jnp.float32) * 5.0

    # Compute the reference first (the kernel aliases its output onto x).
    ref = reference_forward(x, w)

    out = add_matrix_forward(x, w)
    out = jax.block_until_ready(out)

    assert out.shape == (5, 5)
    assert jnp.allclose(out, ref, atol=1e-6, rtol=1e-6)
    print("KERNEL_OK")
</pallas_src>

<mosaic_0001>
module attributes {stable_mosaic.version = 11 : i64} {
  func.func @add_matrix_kernel(%arg0: memref<5x5xf32, #tpu.memory_space<vmem>>, %arg1: memref<5x5xf32, #tpu.memory_space<vmem>>, %arg2: memref<5x5xf32, #tpu.memory_space<vmem>>) attributes {dimension_semantics = [], scalar_prefetch = 0 : i64, scratch_operands = 0 : i64, tpu.core_type = #tpu.core_type<tc>} {
    %c0 = arith.constant 0 : index
    %c0_0 = arith.constant 0 : index
    %0 = vector.load %arg0[%c0, %c0_0] : memref<5x5xf32, #tpu.memory_space<vmem>>, vector<5x5xf32>
    %c0_1 = arith.constant 0 : index
    %c0_2 = arith.constant 0 : index
    %1 = vector.load %arg1[%c0_1, %c0_2] : memref<5x5xf32, #tpu.memory_space<vmem>>, vector<5x5xf32>
    %2 = arith.addf %0, %1 : vector<5x5xf32>
    %c0_3 = arith.constant 0 : index
    %c0_4 = arith.constant 0 : index
    %3 = vector.load %arg2[%c0_3, %c0_4] : memref<5x5xf32, #tpu.memory_space<vmem>>, vector<5x5xf32>
    tpu.vector_store %arg2[%c0_3, %c0_4], %2 {strides = array<i32>} : memref<5x5xf32, #tpu.memory_space<vmem>>, vector<5x5xf32>,
    return
  }
}

</mosaic_0001>

<llo_original>
// kernel: tpu_custom_call.1
$region0: #{tpu_custom_call.1}
  #allocation0 [shape = 'u32[]', space=smem, size = 0x4, offset = 0x4, fixed_abs, tag = 'smem constant byte address 0x4 - core index']
  #allocation1 [shape = 'u32[144,128]{1,0:T(1,128)}', space=vmem, size = 0x12000, scoped, tag = 'internal scratch']
  %s0 = inlined_call_operand.hbm [shape: f32[5,5], index: 0, kind: input, shape index: {}, may-alias: {0,2}]
  %s1 = inlined_call_operand.vmem [shape: f32[5,5], index: 1, kind: input, shape index: {}]
  %s2 = inlined_call_operand.hbm [shape: f32[5,5], index: 2, kind: output, shape index: {}, may-alias: {0,2}]
  %s3 = sld [smem:[#allocation0]]
  $region22: #{tpu_custom_call.1} parent=0
    _
  %s5 = ssub.s32 1, %s3
  %s6 = scalar_select 0, %s5, %s3
  $region1: #{tpu_custom_call.1} parent=0
    #allocation2 [shape = 'u8[4096]{0}', space=vmem, size = 0x1000, scoped, tag = 'input window, operand 0, single buffered']
    #allocation3 [shape = 's32[1]{0}', space=sflag, size = 0x4, scoped, tag = 'scoped memory for tpu_custom_call.1']
    #allocation4 [shape = 's32[1]{0}', space=sflag, size = 0x4, scoped, tag = 'scoped memory for tpu_custom_call.1']
    #allocation5 [shape = 'u8[4096]{0}', space=vmem, size = 0x1000, scoped, tag = 'output window, operand 0, single buffered']
    %7 = vsyncpa [#allocation3], 0
    %8 = vsyncpa [#allocation4], 0
    // Predicated region
    $region2: #{tpu_custom_call.1} parent=1 // pred_check
      _
    $region3: #{tpu_custom_call.1} parent=1 // pred_check_branch
      %10 = sbr.rel (0) target = $region5
    $region4: #{tpu_custom_call.1} parent=1 // pred_region
      %s12 = ssub.s32 128, 128
      %13 = vsyncadd [#allocation3], %s12
      %s15 = sshll.u32 [#allocation2], 4
      %s16 = int_to_ptr.vmem [resolvable:$true] %s15
      %18 = dma.hbm_to_vmem [thread:$0]  %s0, 128, %s16, [#allocation3]
    $region5: #{tpu_custom_call.1} parent=1 // pred_fallthru
      _
    // Predicated region
    $region6: #{tpu_custom_call.1} parent=1 // pred_check
      _
    $region7: #{tpu_custom_call.1} parent=1 // pred_check_branch
      %20 = sbr.rel (0) target = $region9
    $region8: #{tpu_custom_call.1} parent=1 // pred_region
      _
    $region9: #{tpu_custom_call.1} parent=1 // pred_fallthru
      _
    // Predicated region
    $region10: #{tpu_custom_call.1} parent=1 // pred_check
      _
    $region11: #{tpu_custom_call.1} parent=1 // pred_check_branch
      %22 = sbr.rel (0) target = $region13
    $region12: #{tpu_custom_call.1} parent=1 // pred_region
      %23 = dma.done [#allocation3], 128
    $region13: #{tpu_custom_call.1} parent=1 // pred_fallthru
      _
    %v24 = vld [vmem:[#allocation2] sm:$0x1f]
    %v25 = vld [vmem:[%s1] sm:$0x1f]
    %v26 = vadd.f32 %v24, %v25
    %vm27 = vcmask 36864
    %28 = vst.msk [vmem:[#allocation5] sm:$0x1f] %vm27, %v26
    // Predicated region
    $region14: #{tpu_custom_call.1} parent=1 // pred_check
      _
    $region15: #{tpu_custom_call.1} parent=1 // pred_check_branch
      %30 = sbr.rel (0) target = $region17
    $region16: #{tpu_custom_call.1} parent=1 // pred_region
      %s32 = ssub.s32 128, 128
      %33 = vsyncadd [#allocation4], %s32
      %s35 = sshll.u32 [#allocation5], 4
      %s36 = int_to_ptr.vmem [resolvable:$true] %s35
      %38 = dma.vmem_to_hbm [thread:$0]  %s36, 128, %s2, [#allocation4]
    $region17: #{tpu_custom_call.1} parent=1 // pred_fallthru
      _
    // Predicated region
    $region18: #{tpu_custom_call.1} parent=1 // pred_check
      _
    $region19: #{tpu_custom_call.1} parent=1 // pred_check_branch
      %40 = sbr.rel (0) target = $region21
    $region20: #{tpu_custom_call.1} parent=1 // pred_region
      %41 = dma.done [#allocation4], 128
    $region21: #{tpu_custom_call.1} parent=1 // pred_fallthru
      _
    %42 = vsyncpa [#allocation3], 1
    %43 = vsyncpa [#allocation4], 1

</llo_original>
